<compile_context>
chip_gen: v7x
topology: tpu7x:2x2x1
jax: 0.10.0
libtpu: 0.0.40
codegen_flags: <defaults>
</compile_context>

<pallas_src>
import math

import jax
import jax.numpy as jnp
import numpy as np
from jax.experimental import pallas as pl
from jax.experimental.pallas import tpu as pltpu


# ----------------------------- Kernel -------------------------------------- #

def make_fused_kernel(num_lc_layers):
    """Fused forward: fc1(diff) matmul + [sigmoid + block-diag local matmul]*L."""

    def kernel(*refs):
        x_ref = refs[0]          # [bn, d]
        w1t_ref = refs[1]        # [d, d*m1]   (pre-transposed, pos-neg folded)
        b1_ref = refs[2]         # [1, d*m1]
        lc_refs = refs[3:3 + 2 * num_lc_layers]
        o_ref = refs[3 + 2 * num_lc_layers]   # [bn, d]

        # fc1_pos(x) - fc1_neg(x) == x @ (Wp - Wn).T + (bp - bn)
        h = jnp.dot(x_ref[...], w1t_ref[...],
                    preferred_element_type=jnp.float32) + b1_ref[...]

        # LocallyConnected layers: sigmoid + block-diagonal matmul, all flat 2-D.
        for l in range(num_lc_layers):
            w_ref = lc_refs[2 * l]        # [d*m_in, d*m_out] block-diagonal
            b_ref = lc_refs[2 * l + 1]    # [1, d*m_out]
            s = jax.nn.sigmoid(h)
            h = jnp.dot(s, w_ref[...],
                        preferred_element_type=jnp.float32) + b_ref[...]

        # last layer has m_out == 1 -> h is already the squeezed [bn, d] output.
        o_ref[...] = h.astype(o_ref.dtype)

    return kernel


# ----------------------------- Wrapper -------------------------------------- #

def _round_up(a, b):
    return ((a + b - 1) // b) * b


def _block_diag_weight(w):
    """LocallyConnected weight [d, m_in, m_out] -> block-diagonal [d*m_in, d*m_out]
    so that out_flat[:, j*m_out + k] = sum_m h_flat[:, j*m_in + m] * w[j, m, k]."""
    d, m_in, m_out = w.shape
    eye = jnp.eye(d, dtype=w.dtype)
    wbd = jnp.einsum("jab,jk->jakb", w, eye)           # [d, m_in, d, m_out]
    return wbd.reshape(d * m_in, d * m_out)


def dynamic_mlp_forward(x, params, dims, *, block_n=512):
    """Full DynamicMLP.forward as a single fused, batch-tiled pallas_call."""
    n, d = x.shape
    m1 = dims[1]
    dm1 = d * m1

    # --- fold fc1_pos - fc1_neg once (XLA side), pre-transpose for the MXU ---
    w1t = (params["w1_pos"] - params["w1_neg"]).T                # [d, d*m1]
    b1 = (params["b1_pos"] - params["b1_neg"]).reshape(1, dm1)   # [1, d*m1]

    # --- build block-diagonal weights / flat biases for each LC layer ---
    lc_inputs = []
    lc_specs = []
    for (w, b) in params["fc2"]:
        d_, m_in, m_out = w.shape
        wbd = _block_diag_weight(w)                      # [d*m_in, d*m_out]
        bflat = b.reshape(1, d_ * m_out)                 # [1, d*m_out]
        lc_inputs += [wbd, bflat]
        lc_specs += [
            pl.BlockSpec((d_ * m_in, d_ * m_out), lambda i: (0, 0)),
            pl.BlockSpec((1, d_ * m_out), lambda i: (0, 0)),
        ]

    # --- batch tiling: bn multiple of 8, pad ragged n with zero rows ---
    # VMEM budget per tile (f32): 2*bn*d (x dbl-buf) + 2*bn*d (out dbl-buf)
    # + resident weights (~d*dm1 + sum d*m_in*d*m_out) -- tiny vs 32/64 MiB,
    # so block_n=512 is safe on v5e/v6e/v7x.
    bn = min(block_n, _round_up(n, 8))
    n_pad = _round_up(n, bn)
    if n_pad != n:
        x = jnp.pad(x, ((0, n_pad - n), (0, 0)))

    grid = (n_pad // bn,)
    kernel = make_fused_kernel(len(params["fc2"]))

    out = pl.pallas_call(
        kernel,
        out_shape=jax.ShapeDtypeStruct((n_pad, d), jnp.float32),
        grid=grid,
        in_specs=[
            pl.BlockSpec((bn, d), lambda i: (i, 0)),       # x tile
            pl.BlockSpec((d, dm1), lambda i: (0, 0)),      # folded fc1 weight
            pl.BlockSpec((1, dm1), lambda i: (0, 0)),      # folded fc1 bias
        ] + lc_specs,
        out_specs=pl.BlockSpec((bn, d), lambda i: (i, 0)),
        compiler_params=pltpu.CompilerParams(
            dimension_semantics=("parallel",)),            # megacore-shard batch
    )(x, w1t, b1, *lc_inputs)

    return out[:n]


# ----------------------------- Reference (pure JAX) ------------------------- #

def dynamic_mlp_reference(x, params, dims):
    d, m1 = dims[0], dims[1]
    pos = x @ params["w1_pos"].T + params["b1_pos"]
    neg = x @ params["w1_neg"].T + params["b1_neg"]
    h = (pos - neg).reshape(-1, d, m1)
    for (w, b) in params["fc2"]:
        s = jax.nn.sigmoid(h)
        h = jnp.einsum("ndm,dmk->ndk", s, w) + b[None, :, :]
    return jnp.squeeze(h, axis=2)


# ----------------------------- Param construction --------------------------- #

def make_params(key, dims):
    d, m1 = dims[0], dims[1]
    keys = jax.random.split(key, 4 + 2 * (len(dims) - 2))

    bnd = 1.0 / math.sqrt(d)
    w1_pos = jax.random.uniform(keys[0], (d * m1, d), jnp.float32, -bnd, bnd)
    b1_pos = jax.random.uniform(keys[1], (d * m1,), jnp.float32, -bnd, bnd)
    w1_neg = jax.random.uniform(keys[2], (d * m1, d), jnp.float32, -bnd, bnd)
    b1_neg = jax.random.uniform(keys[3], (d * m1,), jnp.float32, -bnd, bnd)

    fc2 = []
    kidx = 4
    for l in range(len(dims) - 2):
        m_in, m_out = dims[l + 1], dims[l + 2]
        kb = 1.0 / math.sqrt(m_in)
        w = jax.random.uniform(keys[kidx], (d, m_in, m_out), jnp.float32, -kb, kb)
        b = jax.random.uniform(keys[kidx + 1], (d, m_out), jnp.float32, -kb, kb)
        fc2.append((w, b))
        kidx += 2

    return dict(w1_pos=w1_pos, b1_pos=b1_pos,
                w1_neg=w1_neg, b1_neg=b1_neg, fc2=fc2)


# ----------------------------- Main ----------------------------------------- #

if __name__ == "__main__":
    key = jax.random.PRNGKey(0)

    # Test 1: single LocallyConnected layer (matches original example), n % 8 == 0.
    dims_a = (4, 16, 1)
    ka, kb_, kc = jax.random.split(key, 3)
    params_a = make_params(ka, dims_a)
    x_a = jax.random.normal(kb_, (8, dims_a[0]), dtype=jnp.float32)

    out_a = jax.block_until_ready(dynamic_mlp_forward(x_a, params_a, dims_a))
    ref_a = jax.block_until_ready(dynamic_mlp_reference(x_a, params_a, dims_a))
    assert out_a.shape == (8, dims_a[0])
    np.testing.assert_allclose(np.asarray(out_a), np.asarray(ref_a),
                               rtol=1e-5, atol=1e-5)

    # Test 2: extra hidden LC layer + ragged batch (exercises padding path).
    dims_b = (4, 16, 8, 1)
    kd, ke = jax.random.split(kc)
    params_b = make_params(kd, dims_b)
    x_b = jax.random.normal(ke, (19, dims_b[0]), dtype=jnp.float32)

    out_b = jax.block_until_ready(dynamic_mlp_forward(x_b, params_b, dims_b))
    ref_b = jax.block_until_ready(dynamic_mlp_reference(x_b, params_b, dims_b))
    assert out_b.shape == (19, dims_b[0])
    np.testing.assert_allclose(np.asarray(out_b), np.asarray(ref_b),
                               rtol=1e-5, atol=1e-5)

    print("KERNEL_OK")
</pallas_src>

<mosaic_0001>
module attributes {stable_mosaic.version = 11 : i64} {
  func.func @kernel(%arg0: i32, %arg1: memref<8x4xf32, #tpu.memory_space<vmem>>, %arg2: memref<4x64xf32, #tpu.memory_space<vmem>>, %arg3: memref<1x64xf32, #tpu.memory_space<vmem>>, %arg4: memref<64x4xf32, #tpu.memory_space<vmem>>, %arg5: memref<1x4xf32, #tpu.memory_space<vmem>>, %arg6: memref<8x4xf32, #tpu.memory_space<vmem>>) attributes {dimension_semantics = [#tpu.dimension_semantics<parallel>], iteration_bounds = array<i64: 1>, scalar_prefetch = 0 : i64, scratch_operands = 0 : i64, tpu.core_type = #tpu.core_type<tc>, window_params = [{transform_indices = @transform_0, window_bounds = array<i64: 8, 4>}, {pipeline_mode = #tpu.pipeline_mode<synchronous>, transform_indices = @transform_1, window_bounds = array<i64: 4, 64>}, {pipeline_mode = #tpu.pipeline_mode<synchronous>, transform_indices = @transform_2, window_bounds = array<i64: 1, 64>}, {pipeline_mode = #tpu.pipeline_mode<synchronous>, transform_indices = @transform_3, window_bounds = array<i64: 64, 4>}, {pipeline_mode = #tpu.pipeline_mode<synchronous>, transform_indices = @transform_4, window_bounds = array<i64: 1, 4>}, {transform_indices = @transform_5, window_bounds = array<i64: 8, 4>}]} {
    %c0 = arith.constant 0 : index
    %c0_0 = arith.constant 0 : index
    %0 = vector.load %arg1[%c0, %c0_0] : memref<8x4xf32, #tpu.memory_space<vmem>>, vector<8x4xf32>
    %c0_1 = arith.constant 0 : index
    %c0_2 = arith.constant 0 : index
    %1 = vector.load %arg2[%c0_1, %c0_2] : memref<4x64xf32, #tpu.memory_space<vmem>>, vector<4x64xf32>
    %cst = arith.constant dense<0.000000e+00> : vector<8x64xf32>
    %2 = tpu.matmul %0, %1, %cst {dimension_numbers = #tpu.dot_dimension_numbers<[1], [0], [0], [1], [0, 0, 1, 1], [], []>} : vector<8x4xf32>, vector<4x64xf32>, vector<8x64xf32> -> vector<8x64xf32>
    %c0_3 = arith.constant 0 : index
    %c0_4 = arith.constant 0 : index
    %3 = vector.load %arg3[%c0_3, %c0_4] : memref<1x64xf32, #tpu.memory_space<vmem>>, vector<1x64xf32>
    %4 = vector.broadcast %3 : vector<1x64xf32> to vector<8x64xf32>
    %5 = arith.addf %2, %4 : vector<8x64xf32>
    %6 = arith.negf %5 : vector<8x64xf32>
    %7 = math.exp %6 : vector<8x64xf32>
    %cst_5 = arith.constant 1.000000e+00 : f32
    %8 = vector.broadcast %cst_5 : f32 to vector<8x64xf32>
    %9 = arith.addf %8, %7 : vector<8x64xf32>
    %10 = arith.divf %8, %9 : vector<8x64xf32>
    %c0_6 = arith.constant 0 : index
    %c0_7 = arith.constant 0 : index
    %11 = vector.load %arg4[%c0_6, %c0_7] : memref<64x4xf32, #tpu.memory_space<vmem>>, vector<64x4xf32>
    %cst_8 = arith.constant dense<0.000000e+00> : vector<8x4xf32>
    %12 = tpu.matmul %10, %11, %cst_8 {dimension_numbers = #tpu.dot_dimension_numbers<[1], [0], [0], [1], [0, 0, 1, 1], [], []>} : vector<8x64xf32>, vector<64x4xf32>, vector<8x4xf32> -> vector<8x4xf32>
    %c0_9 = arith.constant 0 : index
    %c0_10 = arith.constant 0 : index
    %13 = vector.load %arg5[%c0_9, %c0_10] : memref<1x4xf32, #tpu.memory_space<vmem>>, vector<1x4xf32>
    %14 = vector.broadcast %13 : vector<1x4xf32> to vector<8x4xf32>
    %15 = arith.addf %12, %14 : vector<8x4xf32>
    %c0_11 = arith.constant 0 : index
    %c0_12 = arith.constant 0 : index
    %16 = vector.load %arg6[%c0_11, %c0_12] : memref<8x4xf32, #tpu.memory_space<vmem>>, vector<8x4xf32>
    tpu.vector_store %arg6[%c0_11, %c0_12], %15 {strides = array<i32>} : memref<8x4xf32, #tpu.memory_space<vmem>>, vector<8x4xf32>,
    return
  }
  func.func @transform_0(%arg0: i32) -> (i32, i32) {
    %c0_i32 = arith.constant 0 : i32
    %c0_i32_0 = arith.constant 0 : i32
    return %arg0, %c0_i32 : i32, i32
  }
  func.func @transform_1(%arg0: i32) -> (i32, i32) {
    %c0_i32 = arith.constant 0 : i32
    %c0_i32_0 = arith.constant 0 : i32
    %c0_i32_1 = arith.constant 0 : i32
    return %c0_i32, %c0_i32_0 : i32, i32
  }
  func.func @transform_2(%arg0: i32) -> (i32, i32) {
    %c0_i32 = arith.constant 0 : i32
    %c0_i32_0 = arith.constant 0 : i32
    %c0_i32_1 = arith.constant 0 : i32
    return %c0_i32, %c0_i32_0 : i32, i32
  }
  func.func @transform_3(%arg0: i32) -> (i32, i32) {
    %c0_i32 = arith.constant 0 : i32
    %c0_i32_0 = arith.constant 0 : i32
    %c0_i32_1 = arith.constant 0 : i32
    return %c0_i32, %c0_i32_0 : i32, i32
  }
  func.func @transform_4(%arg0: i32) -> (i32, i32) {
    %c0_i32 = arith.constant 0 : i32
    %c0_i32_0 = arith.constant 0 : i32
    %c0_i32_1 = arith.constant 0 : i32
    return %c0_i32, %c0_i32_0 : i32, i32
  }
  func.func @transform_5(%arg0: i32) -> (i32, i32) {
    %c0_i32 = arith.constant 0 : i32
    %c0_i32_0 = arith.constant 0 : i32
    return %arg0, %c0_i32 : i32, i32
  }
}

</mosaic_0001>

<llo_original>
// kernel: tpu_custom_call.1
$region0: #{tpu_custom_call.1}
  #allocation0 [shape = 'u32[]', space=smem, size = 0x4, offset = 0x4, fixed_abs, tag = 'smem constant byte address 0x4 - core index']
  #allocation1 [shape = 'u32[144,128]{1,0:T(1,128)}', space=vmem, size = 0x12000, scoped, tag = 'internal scratch']
  %s0 = inlined_call_operand.vmem [shape: f32[8,4], index: 0, kind: input, shape index: {}]
  %s1 = inlined_call_operand.vmem [shape: f32[4,64], index: 1, kind: input, shape index: {}]
  %s2 = inlined_call_operand.vmem [shape: f32[1,64], index: 2, kind: input, shape index: {}]
  %s3 = inlined_call_operand.vmem [shape: f32[64,4], index: 3, kind: input, shape index: {}]
  %s4 = inlined_call_operand.vmem [shape: f32[1,4], index: 4, kind: input, shape index: {}]
  %s5 = inlined_call_operand.vmem [shape: f32[8,4], index: 5, kind: output, shape index: {}]
  %s6 = sld [smem:[#allocation0]]
  $region30: #{tpu_custom_call.1} parent=0
    _
  %s8 = ssub.s32 1, %s6
  %s9 = scalar_select 0, %s8, %s6
  // Predicated region
  $region2: #{tpu_custom_call.1} parent=0 // pred_check
    _
  $region3: #{tpu_custom_call.1} parent=0 // pred_check_branch
    %11 = sbr.rel (0) target = $region5
  $region4: #{tpu_custom_call.1} parent=0 // pred_region
    _
  $region5: #{tpu_custom_call.1} parent=0 // pred_fallthru
    _
  // Predicated region
  $region6: #{tpu_custom_call.1} parent=0 // pred_check
    _
  $region7: #{tpu_custom_call.1} parent=0 // pred_check_branch
    %13 = sbr.rel (0) target = $region9
  $region8: #{tpu_custom_call.1} parent=0 // pred_region
    _
  $region9: #{tpu_custom_call.1} parent=0 // pred_fallthru
    _
  // Predicated region
  $region10: #{tpu_custom_call.1} parent=0 // pred_check
    _
  $region11: #{tpu_custom_call.1} parent=0 // pred_check_branch
    %15 = sbr.rel (0) target = $region13
  $region12: #{tpu_custom_call.1} parent=0 // pred_region
    _
  $region13: #{tpu_custom_call.1} parent=0 // pred_fallthru
    _
  // Predicated region
  $region14: #{tpu_custom_call.1} parent=0 // pred_check
    _
  $region15: #{tpu_custom_call.1} parent=0 // pred_check_branch
    %17 = sbr.rel (0) target = $region17
  $region16: #{tpu_custom_call.1} parent=0 // pred_region
    _
  $region17: #{tpu_custom_call.1} parent=0 // pred_fallthru
    _
  // Predicated region
  $region18: #{tpu_custom_call.1} parent=0 // pred_check
    _
  $region19: #{tpu_custom_call.1} parent=0 // pred_check_branch
    %19 = sbr.rel (0) target = $region21
  $region20: #{tpu_custom_call.1} parent=0 // pred_region
    _
  $region21: #{tpu_custom_call.1} parent=0 // pred_fallthru
    _
  %v20 = vld [vmem:[%s0] sm:$0xff]
  %v21 = vld [vmem:[%s1] sm:$0xf]
  %v22 = vld [vmem:[%s2] sm:$0x1]
  %v24 = vlaneseq
  %v25 = vshrl.u32 %v24, 7
  %v26 = vsub.s32 0, %v25
  %v27 = vrot.slane %v22, %v26
  %vm29 = vcmask 31744
  %v31 = vsel %vm29, %v20, 0
  %vm33 = vcmask 1043456
  %v35 = vsel %vm33, %v21, 0
  %37 = vmatprep.subr.mxu0 0.0
  %38 = vmatpush1.msra.mxu0 %v35
  %39 = vmatprep.subr.mxu0 0.0
  %40 = vmatpush1.msra.mxu0 0.0
  %41 = vmatprep.subr.mxu0 0.0
  %42 = vmatpush1.msra.mxu0 0.0
  %43 = vmatprep.subr.mxu0 0.0
  %44 = vmatpush1.msra.mxu0 0.0
  %45 = vmatprep.subr.mxu0 0.0
  %46 = vmatpush1.msra.mxu0 0.0
  %47 = vmatprep.subr.mxu0 0.0
  %48 = vmatpush1.msra.mxu0 0.0
  %49 = vmatprep.subr.mxu0 0.0
  %50 = vmatpush1.msra.mxu0 0.0
  %51 = vmatprep.subr.mxu0 0.0
  %52 = vmatpush1.msra.mxu0 0.0
  %53 = vmatprep.subr.mxu0 0.0
  %54 = vmatpush1.msra.mxu0 0.0
  %55 = vmatprep.subr.mxu0 0.0
  %56 = vmatpush1.msra.mxu0 0.0
  %57 = vmatprep.subr.mxu0 0.0
  %58 = vmatpush1.msra.mxu0 0.0
  %59 = vmatprep.subr.mxu0 0.0
  %60 = vmatpush1.msra.mxu0 0.0
  %61 = vmatprep.subr.mxu0 0.0
  %62 = vmatpush1.msra.mxu0 0.0
  %63 = vmatprep.subr.mxu0 0.0
  %64 = vmatpush1.msra.mxu0 0.0
  %65 = vmatprep.subr.mxu0 0.0
  %66 = vmatpush1.msra.mxu0 0.0
  %67 = vmatprep.subr.mxu0 0.0
  %68 = vmatpush1.msra.mxu0 0.0
  %69 = vmatprep.subr.mxu0 0.0
  %70 = vmatpush1.msra.mxu0 0.0
  %71 = vmatprep.subr.mxu0 0.0
  %72 = vmatpush1.msra.mxu0 0.0
  %73 = vmatprep.subr.mxu0 0.0
  %74 = vmatpush1.msra.mxu0 0.0
  %75 = vmatprep.subr.mxu0 0.0
  %76 = vmatpush1.msra.mxu0 0.0
  %77 = vmatprep.subr.mxu0 0.0
  %78 = vmatpush1.msra.mxu0 0.0
  %79 = vmatprep.subr.mxu0 0.0
  %80 = vmatpush1.msra.mxu0 0.0
  %81 = vmatprep.subr.mxu0 0.0
  %82 = vmatpush1.msra.mxu0 0.0
  %83 = vmatprep.subr.mxu0 0.0
  %84 = vmatpush1.msra.mxu0 0.0
  %85 = vmatprep.subr.mxu0 0.0
  %86 = vmatpush1.msra.mxu0 0.0
  %87 = vmatprep.subr.mxu0 0.0
  %88 = vmatpush1.msra.mxu0 0.0
  %89 = vmatprep.subr.mxu0 0.0
  %90 = vmatpush1.msra.mxu0 0.0
  %91 = vmatprep.subr.mxu0 0.0
  %92 = vmatpush1.msra.mxu0 0.0
  %93 = vmatprep.subr.mxu0 0.0
  %94 = vmatpush1.msra.mxu0 0.0
  %95 = vmatprep.subr.mxu0 0.0
  %96 = vmatpush1.msra.mxu0 0.0
  %97 = vmatprep.subr.mxu0 0.0
  %98 = vmatpush1.msra.mxu0 0.0
  %99 = vmatprep.subr.mxu0 0.0
  %100 = vmatpush1.msra.mxu0 0.0
  %101 = vmatprep.mubr.f32.mxu0 0.0
  %102 = vmatmul.mubr.f32.gmra.mrb[0].mxu0 %v31
  %v103 = vpop.f32.mrb[0].mxu0
  %v104 = vadd.f32 %v27, %v103
  %v105 = vpop.f32.mrb[0].mxu0
  %106 = vdwg.mxu0
  %v107 = vxor.u32 %v104, 2147483648
  %v108 = vmul.f32 %v107, 1.442695
  %v109 = vpow.pop %v108
  %v110 = vadd.f32 %v109, 1.0
  %v111 = vrcp.pop %v110
  %v112 = vmul.f32 1.0, %v111
  %v113 = vld [vmem:[%s3] sm:$0xff]
  %v114 = vld [vmem:[%s3 + $0x8] sm:$0xff]
  %v115 = vld [vmem:[%s3 + $0x10] sm:$0xff]
  %v116 = vld [vmem:[%s3 + $0x18] sm:$0xff]
  %v117 = vld [vmem:[%s3 + $0x20] sm:$0xff]
  %v118 = vld [vmem:[%s3 + $0x28] sm:$0xff]
  %v119 = vld [vmem:[%s3 + $0x30] sm:$0xff]
  %v120 = vld [vmem:[%s3 + $0x38] sm:$0xff]
  %v121 = vld [vmem:[%s4] sm:$0x1]
  %v123 = vlaneseq
  %v124 = vshrl.u32 %v123, 7
  %v125 = vsub.s32 0, %v124
  %v126 = vrot.slane %v121, %v125
  %vm128 = vcmask 523264
  %v130 = vsel %vm128, %v112, 0
  %132 = vmatprep.subr.mxu0 0.0
  %133 = vmatpush1.msra.mxu0 %v113
  %134 = vmatprep.subr.mxu0 0.0
  %135 = vmatpush1.msra.mxu0 %v114
  %136 = vmatprep.subr.mxu0 0.0
  %137 = vmatpush1.msra.mxu0 %v115
  %138 = vmatprep.subr.mxu0 0.0
  %139 = vmatpush1.msra.mxu0 %v116
  %140 = vmatprep.subr.mxu0 0.0
  %141 = vmatpush1.msra.mxu0 %v117
  %142 = vmatprep.subr.mxu0 0.0
  %143 = vmatpush1.msra.mxu0 %v118
  %144 = vmatprep.subr.mxu0 0.0
  %145 = vmatpush1.msra.mxu0 %v119
  %146 = vmatprep.subr.mxu0 0.0
  %147 = vmatpush1.msra.mxu0 %v120
  %148 = vmatprep.subr.mxu0 0.0
  %149 = vmatpush1.msra.mxu0 0.0
  %150 = vmatprep.subr.mxu0 0.0
  %151 = vmatpush1.msra.mxu0 0.0
  %152 = vmatprep.subr.mxu0 0.0
  %153 = vmatpush1.msra.mxu0 0.0
  %154 = vmatprep.subr.mxu0 0.0
  %155 = vmatpush1.msra.mxu0 0.0
  %156 = vmatprep.subr.mxu0 0.0
  %157 = vmatpush1.msra.mxu0 0.0
  %158 = vmatprep.subr.mxu0 0.0
  %159 = vmatpush1.msra.mxu0 0.0
  %160 = vmatprep.subr.mxu0 0.0
  %161 = vmatpush1.msra.mxu0 0.0
  %162 = vmatprep.subr.mxu0 0.0
  %163 = vmatpush1.msra.mxu0 0.0
  %164 = vmatprep.subr.mxu0 0.0
  %165 = vmatpush1.msra.mxu0 0.0
  %166 = vmatprep.subr.mxu0 0.0
  %167 = vmatpush1.msra.mxu0 0.0
  %168 = vmatprep.subr.mxu0 0.0
  %169 = vmatpush1.msra.mxu0 0.0
  %170 = vmatprep.subr.mxu0 0.0
  %171 = vmatpush1.msra.mxu0 0.0
  %172 = vmatprep.subr.mxu0 0.0
  %173 = vmatpush1.msra.mxu0 0.0
  %174 = vmatprep.subr.mxu0 0.0
  %175 = vmatpush1.msra.mxu0 0.0
  %176 = vmatprep.subr.mxu0 0.0
  %177 = vmatpush1.msra.mxu0 0.0
  %178 = vmatprep.subr.mxu0 0.0
  %179 = vmatpush1.msra.mxu0 0.0
  %180 = vmatprep.subr.mxu0 0.0
  %181 = vmatpush1.msra.mxu0 0.0
  %182 = vmatprep.subr.mxu0 0.0
  %183 = vmatpush1.msra.mxu0 0.0
  %184 = vmatprep.subr.mxu0 0.0
  %185 = vmatpush1.msra.mxu0 0.0
  %186 = vmatprep.subr.mxu0 0.0
  %187 = vmatpush1.msra.mxu0 0.0
  %188 = vmatprep.subr.mxu0 0.0
  %189 = vmatpush1.msra.mxu0 0.0
  %190 = vmatprep.subr.mxu0 0.0
  %191 = vmatpush1.msra.mxu0 0.0
  %192 = vmatprep.subr.mxu0 0.0
  %193 = vmatpush1.msra.mxu0 0.0
  %194 = vmatprep.subr.mxu0 0.0
  %195 = vmatpush1.msra.mxu0 0.0
  %196 = vmatprep.mubr.f32.mxu0 0.0
  %197 = vmatmul.mubr.f32.gmra.mrb[0].mxu0 %v130
  %v198 = vpop.f32.mrb[0].mxu0
  %v199 = vadd.f32 %v126, %v198
  %v200 = vpop.f32.mrb[0].mxu0
  %201 = vdwg.mxu0
  %202 = vst.msk [vmem:[%s5] sm:$0xff] %vm29, %v199
  // Predicated region
  $region22: #{tpu_custom_call.1} parent=0 // pred_check
    _
  $region23: #{tpu_custom_call.1} parent=0 // pred_check_branch
    %204 = sbr.rel (0) target = $region25
  $region24: #{tpu_custom_call.1} parent=0 // pred_region
    _
  $region25: #{tpu_custom_call.1} parent=0 // pred_fallthru
    _
  // Predicated region
  $region26: #{tpu_custom_call.1} parent=0 // pred_check
    _
  $region27: #{tpu_custom_call.1} parent=0 // pred_check_branch
    %206 = sbr.rel (0) target = $region29
  $region28: #{tpu_custom_call.1} parent=0 // pred_region
    _
  $region29: #{tpu_custom_call.1} parent=0 // pred_fallthru
    _

</llo_original>
